<compile_context>
chip_gen: v7x
topology: tpu7x:2x2x1
jax: 0.10.0
libtpu: 0.0.40
codegen_flags: <defaults>
</compile_context>

<pallas_src>
import functools

import jax
import jax.numpy as jnp
from jax.experimental import pallas as pl
from jax.experimental.pallas import tpu as pltpu


def _bert_embeddings_kernel(wid_ref,                       # SMEM (B, S_pad) int32 ids
                            pos_ref,                       # (TM, H) contiguous pos slice
                            type_ref,                      # (T, H) VMEM-resident type table
                            tt_ref,                        # (1, TM, 1) int32 token-type ids
                            gamma_ref, beta_ref,           # (1, H) LayerNorm params
                            word_hbm,                      # (V, H) word table, HBM (pl.ANY)
                            out_ref,                       # (1, TM, H) output tile
                            wstage,                        # (TM, H) VMEM staging for word rows
                            sem,                           # DMA semaphore
                            *, tm, eps):
    b = pl.program_id(0)
    s = pl.program_id(1)
    base = s * tm

    # 1) Kick off the word-embedding row gather (HBM -> VMEM staging) for this
    #    tile.  One small DMA per row; addresses come from the SMEM id table.
    @pl.loop(0, tm)
    def _issue(r):
        row = wid_ref[b, base + r]
        pltpu.make_async_copy(word_hbm.at[pl.ds(row, 1), :],
                              wstage.at[pl.ds(r, 1), :], sem).start()

    # 2) While the DMAs are in flight: position slice + token-type select.
    pos = pos_ref[...].astype(jnp.float32)                 # (TM, H)
    tid = tt_ref[0]                                        # (TM, 1) int32
    typ = jnp.zeros_like(pos)
    for t in range(type_ref.shape[0]):                     # static, tiny (T ~ 2)
        sel = (tid == t).astype(jnp.float32)               # (TM, 1) indicator
        typ = typ + sel * type_ref[pl.ds(t, 1), :].astype(jnp.float32)
    acc = pos + typ

    # 3) Wait for the gathered word rows and add them.
    @pl.loop(0, tm)
    def _drain(r):
        pltpu.make_async_copy(word_hbm.at[pl.ds(0, 1), :],
                              wstage.at[pl.ds(r, 1), :], sem).wait()
    x = acc + wstage[...].astype(jnp.float32)              # (TM, H) f32

    # 4) Fused LayerNorm (f32 accumulation, rsqrt on the EUP), single store.
    mean = jnp.mean(x, axis=-1, keepdims=True)
    xc = x - mean
    var = jnp.mean(xc * xc, axis=-1, keepdims=True)
    inv = jax.lax.rsqrt(var + eps)
    y = xc * inv * gamma_ref[...].astype(jnp.float32) + beta_ref[...].astype(jnp.float32)
    # TODO(synk): dropout is identity in eval mode; training-mode dropout would
    # use pltpu.prng_seed + pltpu.stateful_bernoulli here.
    out_ref[0] = y.astype(out_ref.dtype)


def bert_embeddings(input_ids, word_emb, pos_emb, type_emb, gamma, beta,
                    *, token_type_ids=None, eps=1e-12, tm=None):
    """input_ids: (B, S) int; tables: (V,H)/(P,H)/(T,H); gamma/beta: (H,).

    Position ids follow the module default (arange over the sequence).
    """
    # TODO(synk): explicit non-arange position_ids would need the same DMA-gather
    # path as the word table; only the module's default (arange) path is implemented.
    B, S = input_ids.shape
    V, H = word_emb.shape
    P = pos_emb.shape[0]
    T = type_emb.shape[0]

    if token_type_ids is None:
        token_type_ids = jnp.zeros((B, S), dtype=jnp.int32)

    # Large sequence tiles (multiple of 8, capped at 512 rows per grid step).
    if tm is None:
        tm = min(512, pl.cdiv(S, 8) * 8)
    tm = max(8, (tm // 8) * 8)
    s_pad = pl.cdiv(S, tm) * tm
    pad = s_pad - S

    wid = jnp.pad(input_ids.astype(jnp.int32), ((0, 0), (0, pad)))       # pad id 0 (valid row)
    tt = jnp.pad(token_type_ids.astype(jnp.int32), ((0, 0), (0, pad)))
    tt3 = tt.reshape(B, s_pad, 1)                                        # (TM,1) per-row ids

    # Ensure the position table covers the padded sequence (slice rows are
    # contiguous, so the whole padded range must exist).
    if P < s_pad:
        pos_emb = jnp.pad(pos_emb, ((0, s_pad - P), (0, 0)))

    gamma2 = gamma.reshape(1, H)
    beta2 = beta.reshape(1, H)

    kernel = functools.partial(_bert_embeddings_kernel, tm=tm, eps=eps)

    out = pl.pallas_call(
        kernel,
        out_shape=jax.ShapeDtypeStruct((B, s_pad, H), word_emb.dtype),
        grid_spec=pltpu.PrefetchScalarGridSpec(
            num_scalar_prefetch=1,                       # input_ids -> SMEM
            grid=(B, s_pad // tm),
            in_specs=[
                # Contiguous position slice, auto double-buffered.
                pl.BlockSpec((tm, H), lambda b, s, wid: (s, 0)),
                # Tiny token-type table, VMEM-resident (constant index map).
                pl.BlockSpec((T, H), lambda b, s, wid: (0, 0)),
                # Per-tile token-type ids as a (1, TM, 1) int block.
                pl.BlockSpec((1, tm, 1), lambda b, s, wid: (b, s, 0)),
                # LayerNorm params, VMEM-resident.
                pl.BlockSpec((1, H), lambda b, s, wid: (0, 0)),
                pl.BlockSpec((1, H), lambda b, s, wid: (0, 0)),
                # Word table stays in HBM; gathered by manual DMA.
                pl.BlockSpec(memory_space=pl.ANY),
            ],
            out_specs=pl.BlockSpec((1, tm, H), lambda b, s, wid: (b, s, 0)),
            scratch_shapes=[
                pltpu.VMEM((tm, H), word_emb.dtype),     # word-row staging
                pltpu.SemaphoreType.DMA(()),
            ],
        ),
        compiler_params=pltpu.CompilerParams(
            dimension_semantics=("parallel", "parallel")),
    )(wid, pos_emb, type_emb, tt3, gamma2, beta2, word_emb)

    return out[:, :S, :]


def _reference(input_ids, position_ids, token_type_ids,
               word_emb, pos_emb, type_emb, gamma, beta, eps):
    e = word_emb[input_ids] + pos_emb[position_ids] + type_emb[token_type_ids]
    mean = e.mean(axis=-1, keepdims=True)
    var = ((e - mean) ** 2).mean(axis=-1, keepdims=True)
    return (e - mean) / jnp.sqrt(var + eps) * gamma + beta


if __name__ == "__main__":
    # Small shapes consistent with the module: batch=2, seq=8, hidden=128
    # (lane-dense hidden), small vocab sizes.
    B, S, H = 2, 8, 128
    V, P, T = 128, 64, 2
    EPS = 1e-12

    key = jax.random.PRNGKey(0)
    k_w, k_p, k_t, k_g, k_b, k_ids, k_tt = jax.random.split(key, 7)

    word_emb = 0.02 * jax.random.normal(k_w, (V, H), dtype=jnp.float32)
    word_emb = word_emb.at[0].set(0.0)            # padding_idx=0
    pos_emb = 0.02 * jax.random.normal(k_p, (P, H), dtype=jnp.float32)
    type_emb = 0.02 * jax.random.normal(k_t, (T, H), dtype=jnp.float32)
    gamma = 1.0 + 0.02 * jax.random.normal(k_g, (H,), dtype=jnp.float32)
    beta = 0.02 * jax.random.normal(k_b, (H,), dtype=jnp.float32)

    input_ids = jax.random.randint(k_ids, (B, S), 1, V, dtype=jnp.int32)
    token_type_ids = jax.random.randint(k_tt, (B, S), 0, T, dtype=jnp.int32)
    position_ids = jnp.broadcast_to(
        jnp.arange(S, dtype=jnp.int32)[None, :], (B, S))

    out = bert_embeddings(input_ids, word_emb, pos_emb, type_emb, gamma, beta,
                          token_type_ids=token_type_ids, eps=EPS)
    out = jax.block_until_ready(out)

    ref = _reference(input_ids, position_ids, token_type_ids,
                     word_emb, pos_emb, type_emb, gamma, beta, EPS)

    assert out.shape == (B, S, H)
    assert jnp.allclose(out, ref, atol=1e-5, rtol=1e-5), "mismatch vs reference"

    print("KERNEL_OK")
</pallas_src>

<mosaic_0001>
module attributes {stable_mosaic.version = 11 : i64} {
  func.func @_bert_embeddings_kernel(%arg0: i32, %arg1: i32, %arg2: memref<2x8xi32, #tpu.memory_space<smem>>, %arg3: memref<8x128xf32, #tpu.memory_space<vmem>>, %arg4: memref<2x128xf32, #tpu.memory_space<vmem>>, %arg5: memref<1x8x1xi32, #tpu.memory_space<vmem>>, %arg6: memref<1x128xf32, #tpu.memory_space<vmem>>, %arg7: memref<1x128xf32, #tpu.memory_space<vmem>>, %arg8: memref<128x128xf32, #tpu.memory_space<any>>, %arg9: memref<1x8x128xf32, #tpu.memory_space<vmem>>, %arg10: memref<8x128xf32, #tpu.memory_space<vmem>>, %arg11: memref<!tpu.dma_semaphore, #tpu.memory_space<semaphore_mem>>) attributes {dimension_semantics = [#tpu.dimension_semantics<parallel>, #tpu.dimension_semantics<parallel>], iteration_bounds = array<i64: 2, 1>, scalar_prefetch = 1 : i64, scratch_operands = 2 : i64, tpu.core_type = #tpu.core_type<tc>, window_params = [{transform_indices = @transform_0, window_bounds = array<i64: 8, 128>}, {pipeline_mode = #tpu.pipeline_mode<synchronous>, transform_indices = @transform_1, window_bounds = array<i64: 2, 128>}, {transform_indices = @transform_2, window_bounds = array<i64: 1, 8, 1>}, {pipeline_mode = #tpu.pipeline_mode<synchronous>, transform_indices = @transform_3, window_bounds = array<i64: 1, 128>}, {pipeline_mode = #tpu.pipeline_mode<synchronous>, transform_indices = @transform_4, window_bounds = array<i64: 1, 128>}, {}, {transform_indices = @transform_6, window_bounds = array<i64: 1, 8, 128>}]} {
    %c8_i32 = arith.constant 8 : i32
    %0 = arith.muli %arg1, %c8_i32 : i32
    %c0_i32 = arith.constant 0 : i32
    %c8_i32_0 = arith.constant 8 : i32
    %1 = arith.addi %c0_i32, %c8_i32_0 : i32
    %c1_i32 = arith.constant 1 : i32
    scf.for %arg12 = %c0_i32 to %1 step %c1_i32  : i32 {
      %c1_i32_29 = arith.constant 1 : i32
      %53 = arith.muli %arg12, %c1_i32_29 : i32
      %c0_i32_30 = arith.constant 0 : i32
      %54 = arith.addi %c0_i32_30, %53 : i32
      %55 = arith.addi %0, %54 : i32
      %56 = arith.index_cast %arg0 : i32 to index
      %57 = arith.index_cast %55 : i32 to index
      %58 = memref.load %arg2[%56, %57] : memref<2x8xi32, #tpu.memory_space<smem>>
      %c0_i32_31 = arith.constant 0 : i32
      %59 = tpu.memref_slice %arg8[%58, %c0_i32_31] : memref<128x128xf32, #tpu.memory_space<any>> -> memref<1x128xf32, #tpu.memory_space<any>>
      %c0_i32_32 = arith.constant 0 : i32
      %60 = tpu.memref_slice %arg10[%54, %c0_i32_32] : memref<8x128xf32, #tpu.memory_space<vmem>> -> memref<1x128xf32, #tpu.memory_space<vmem>>
      tpu.enqueue_dma source(%59 : memref<1x128xf32, #tpu.memory_space<any>>) target(%60 : memref<1x128xf32, #tpu.memory_space<vmem>>) target_semaphore(%arg11 : memref<!tpu.dma_semaphore, #tpu.memory_space<semaphore_mem>>)
    }
    %c8_i32_1 = arith.constant 8 : i32
    %c0 = arith.constant 0 : index
    %c0_2 = arith.constant 0 : index
    %2 = vector.load %arg3[%c0, %c0_2] : memref<8x128xf32, #tpu.memory_space<vmem>>, vector<8x128xf32>
    %c0_3 = arith.constant 0 : index
    %c0_4 = arith.constant 0 : index
    %c0_5 = arith.constant 0 : index
    %3 = vector.load %arg5[%c0_3, %c0_4, %c0_5] : memref<1x8x1xi32, #tpu.memory_space<vmem>>, vector<1x8x1xi32>
    %4 = vector.shape_cast %3 : vector<1x8x1xi32> to vector<8x1xi32>
    %cst = arith.constant 0.000000e+00 : f32
    %5 = vector.broadcast %cst : f32 to vector<8x128xf32>
    %c0_i32_6 = arith.constant 0 : i32
    %6 = vector.broadcast %c0_i32_6 : i32 to vector<8x1xi32>
    %7 = arith.cmpi eq, %4, %6 : vector<8x1xi32>
    %8 = arith.extui %7 : vector<8x1xi1> to vector<8x1xi32>
    %9 = arith.sitofp %8 : vector<8x1xi32> to vector<8x1xf32>
    %c0_7 = arith.constant 0 : index
    %c0_8 = arith.constant 0 : index
    %10 = vector.load %arg4[%c0_7, %c0_8] : memref<2x128xf32, #tpu.memory_space<vmem>>, vector<1x128xf32>
    %11 = vector.broadcast %9 : vector<8x1xf32> to vector<8x128xf32>
    %12 = vector.broadcast %10 : vector<1x128xf32> to vector<8x128xf32>
    %13 = arith.mulf %11, %12 : vector<8x128xf32>
    %14 = arith.addf %5, %13 : vector<8x128xf32>
    %c1_i32_9 = arith.constant 1 : i32
    %15 = vector.broadcast %c1_i32_9 : i32 to vector<8x1xi32>
    %16 = arith.cmpi eq, %4, %15 : vector<8x1xi32>
    %17 = arith.extui %16 : vector<8x1xi1> to vector<8x1xi32>
    %18 = arith.sitofp %17 : vector<8x1xi32> to vector<8x1xf32>
    %c1 = arith.constant 1 : index
    %c0_10 = arith.constant 0 : index
    %19 = vector.load %arg4[%c1, %c0_10] : memref<2x128xf32, #tpu.memory_space<vmem>>, vector<1x128xf32>
    %20 = vector.broadcast %18 : vector<8x1xf32> to vector<8x128xf32>
    %21 = vector.broadcast %19 : vector<1x128xf32> to vector<8x128xf32>
    %22 = arith.mulf %20, %21 : vector<8x128xf32>
    %23 = arith.addf %14, %22 : vector<8x128xf32>
    %24 = arith.addf %2, %23 : vector<8x128xf32>
    %c0_i32_11 = arith.constant 0 : i32
    %c8_i32_12 = arith.constant 8 : i32
    %25 = arith.addi %c0_i32_11, %c8_i32_12 : i32
    %c1_i32_13 = arith.constant 1 : i32
    scf.for %arg12 = %c0_i32_11 to %25 step %c1_i32_13  : i32 {
      %c1_i32_29 = arith.constant 1 : i32
      %53 = arith.muli %arg12, %c1_i32_29 : i32
      %c0_i32_30 = arith.constant 0 : i32
      %54 = arith.addi %c0_i32_30, %53 : i32
      %c0_i32_31 = arith.constant 0 : i32
      %c0_i32_32 = arith.constant 0 : i32
      %55 = tpu.memref_slice %arg8[%c0_i32_31, %c0_i32_32] : memref<128x128xf32, #tpu.memory_space<any>> -> memref<1x128xf32, #tpu.memory_space<any>>
      %c0_i32_33 = arith.constant 0 : i32
      %56 = tpu.memref_slice %arg10[%54, %c0_i32_33] : memref<8x128xf32, #tpu.memory_space<vmem>> -> memref<1x128xf32, #tpu.memory_space<vmem>>
      tpu.wait_dma2 semaphore(%arg11 : memref<!tpu.dma_semaphore, #tpu.memory_space<semaphore_mem>>) src(%55 : memref<1x128xf32, #tpu.memory_space<any>>) dst(%56 : memref<1x128xf32, #tpu.memory_space<vmem>>)
    }
    %c8_i32_14 = arith.constant 8 : i32
    %c0_15 = arith.constant 0 : index
    %c0_16 = arith.constant 0 : index
    %26 = vector.load %arg10[%c0_15, %c0_16] : memref<8x128xf32, #tpu.memory_space<vmem>>, vector<8x128xf32>
    %27 = arith.addf %24, %26 : vector<8x128xf32>
    %cst_17 = arith.constant dense<0.000000e+00> : vector<8xf32>
    %28 = vector.multi_reduction <add>, %27, %cst_17 [1] : vector<8x128xf32> to vector<8xf32>
    %29 = vector.shape_cast %28 : vector<8xf32> to vector<8x1xf32>
    %cst_18 = arith.constant 1.280000e+02 : f32
    %30 = vector.broadcast %cst_18 : f32 to vector<8x1xf32>
    %31 = arith.divf %29, %30 : vector<8x1xf32>
    %32 = vector.broadcast %31 : vector<8x1xf32> to vector<8x128xf32>
    %33 = arith.subf %27, %32 : vector<8x128xf32>
    %34 = arith.mulf %33, %33 : vector<8x128xf32>
    %cst_19 = arith.constant dense<0.000000e+00> : vector<8xf32>
    %35 = vector.multi_reduction <add>, %34, %cst_19 [1] : vector<8x128xf32> to vector<8xf32>
    %36 = vector.shape_cast %35 : vector<8xf32> to vector<8x1xf32>
    %cst_20 = arith.constant 1.280000e+02 : f32
    %37 = vector.broadcast %cst_20 : f32 to vector<8x1xf32>
    %38 = arith.divf %36, %37 : vector<8x1xf32>
    %cst_21 = arith.constant 9.99999996E-13 : f32
    %39 = vector.broadcast %cst_21 : f32 to vector<8x1xf32>
    %40 = arith.addf %38, %39 : vector<8x1xf32>
    %41 = math.rsqrt %40 : vector<8x1xf32>
    %42 = vector.broadcast %41 : vector<8x1xf32> to vector<8x128xf32>
    %43 = arith.mulf %33, %42 : vector<8x128xf32>
    %c0_22 = arith.constant 0 : index
    %c0_23 = arith.constant 0 : index
    %44 = vector.load %arg6[%c0_22, %c0_23] : memref<1x128xf32, #tpu.memory_space<vmem>>, vector<1x128xf32>
    %45 = vector.broadcast %44 : vector<1x128xf32> to vector<8x128xf32>
    %46 = arith.mulf %43, %45 : vector<8x128xf32>
    %c0_24 = arith.constant 0 : index
    %c0_25 = arith.constant 0 : index
    %47 = vector.load %arg7[%c0_24, %c0_25] : memref<1x128xf32, #tpu.memory_space<vmem>>, vector<1x128xf32>
    %48 = vector.broadcast %47 : vector<1x128xf32> to vector<8x128xf32>
    %49 = arith.addf %46, %48 : vector<8x128xf32>
    %c0_26 = arith.constant 0 : index
    %c0_27 = arith.constant 0 : index
    %c0_28 = arith.constant 0 : index
    %50 = vector.load %arg9[%c0_26, %c0_27, %c0_28] : memref<1x8x128xf32, #tpu.memory_space<vmem>>, vector<1x8x128xf32>
    %51 = vector.shape_cast %50 : vector<1x8x128xf32> to vector<8x128xf32>
    %52 = vector.shape_cast %49 : vector<8x128xf32> to vector<1x8x128xf32>
    tpu.vector_store %arg9[%c0_26, %c0_27, %c0_28], %52 {strides = array<i32>} : memref<1x8x128xf32, #tpu.memory_space<vmem>>, vector<1x8x128xf32>,
    return
  }
  func.func @transform_0(%arg0: i32, %arg1: i32, %arg2: memref<2x8xi32, #tpu.memory_space<smem>>) -> (i32, i32) {
    %c0_i32 = arith.constant 0 : i32
    %c0_i32_0 = arith.constant 0 : i32
    return %arg1, %c0_i32 : i32, i32
  }
  func.func @transform_1(%arg0: i32, %arg1: i32, %arg2: memref<2x8xi32, #tpu.memory_space<smem>>) -> (i32, i32) {
    %c0_i32 = arith.constant 0 : i32
    %c0_i32_0 = arith.constant 0 : i32
    %c0_i32_1 = arith.constant 0 : i32
    return %c0_i32, %c0_i32_0 : i32, i32
  }
  func.func @transform_2(%arg0: i32, %arg1: i32, %arg2: memref<2x8xi32, #tpu.memory_space<smem>>) -> (i32, i32, i32) {
    %c0_i32 = arith.constant 0 : i32
    %c0_i32_0 = arith.constant 0 : i32
    return %arg0, %arg1, %c0_i32 : i32, i32, i32
  }
  func.func @transform_3(%arg0: i32, %arg1: i32, %arg2: memref<2x8xi32, #tpu.memory_space<smem>>) -> (i32, i32) {
    %c0_i32 = arith.constant 0 : i32
    %c0_i32_0 = arith.constant 0 : i32
    %c0_i32_1 = arith.constant 0 : i32
    return %c0_i32, %c0_i32_0 : i32, i32
  }
  func.func @transform_4(%arg0: i32, %arg1: i32, %arg2: memref<2x8xi32, #tpu.memory_space<smem>>) -> (i32, i32) {
    %c0_i32 = arith.constant 0 : i32
    %c0_i32_0 = arith.constant 0 : i32
    %c0_i32_1 = arith.constant 0 : i32
    return %c0_i32, %c0_i32_0 : i32, i32
  }
  func.func @transform_6(%arg0: i32, %arg1: i32, %arg2: memref<2x8xi32, #tpu.memory_space<smem>>) -> (i32, i32, i32) {
    %c0_i32 = arith.constant 0 : i32
    %c0_i32_0 = arith.constant 0 : i32
    return %arg0, %arg1, %c0_i32 : i32, i32, i32
  }
}

</mosaic_0001>

<llo_original>
// kernel: tpu_custom_call.1
$region0: #{tpu_custom_call.1}
  #allocation0 [shape = 'u32[]', space=smem, size = 0x4, offset = 0x4, fixed_abs, tag = 'smem constant byte address 0x4 - core index']
  #allocation1 [shape = 'u32[144,128]{1,0:T(1,128)}', space=vmem, size = 0x12000, scoped, tag = 'internal scratch']
  #allocation2 [shape = 'f32[8,128]{1,0:T(8,128)}', space=vmem, size = 0x1000, scoped, tag = 'scratch operand']
  #allocation3 [shape = 's32[1]{0}', space=sflag, size = 0x4, scoped, tag = 'scratch operand']
  #allocation4 [shape = 's32[1]{0}', space=sflag, size = 0x4, scoped, tag = 'scoped memory for tpu_custom_call.1']
  #allocation5 [shape = 'u8[1024]{0}', space=smem, size = 0x400, scoped, tag = 'prefetched SMEM operand 0']
  #allocation10 [shape = 's32[]', space=sflag, size = 0x4, offset = 0, fixed_abs, tag = 'sflag constant byte address 0x0 - dummy sync flag']
  #allocation11 [shape = 's32[]', space=sflag, size = 0x4, offset = 0, fixed_abs, tag = 'sflag constant byte address 0x0 - dummy sync flag']
  #allocation12 [shape = 'u32[]', space=smem, size = 0x4, offset = 0x44, fixed_abs, tag = 'smem constant byte address 0x44 - assertion arg 0']
  #allocation13 [shape = 'u32[]', space=smem, size = 0x4, offset = 0x48, fixed_abs, tag = 'smem constant byte address 0x48 - assertion arg 1']
  %s0 = inlined_call_operand.vmem [shape: s32[2,8], index: 0, kind: input, shape index: {}]
  %s1 = inlined_call_operand.hbm [shape: f32[64,128], index: 1, kind: input, shape index: {}]
  %s2 = inlined_call_operand.vmem [shape: f32[2,128], index: 2, kind: input, shape index: {}]
  %s3 = inlined_call_operand.vmem [shape: s32[2,8,1], index: 3, kind: input, shape index: {}]
  %s4 = inlined_call_operand.vmem [shape: f32[1,128], index: 4, kind: input, shape index: {}]
  %s5 = inlined_call_operand.vmem [shape: f32[1,128], index: 5, kind: input, shape index: {}]
  %s6 = inlined_call_operand.hbm [shape: f32[128,128], index: 6, kind: input, shape index: {}]
  %s7 = inlined_call_operand.hbm [shape: f32[2,8,128], index: 7, kind: output, shape index: {}]
  %s8 = sld [smem:[#allocation0]]
  $region75: #{tpu_custom_call.1} parent=0
    _
  %s10 = ssub.s32 1, %s8
  %s11 = scalar_select 0, %s10, %s8
  %s12 = sshll.u32 %s0, 4
  %s13 = int_to_ptr.vmem [resolvable:$true] %s12
  %15 = dma.vmem_to_smem %s13, 32, [#allocation5], [#allocation4]
  %16 = dma.done [#allocation4], 32
  %17 = sfence
  $region1: #{tpu_custom_call.1} parent=0
    #allocation6 [shape = 'u8[4096]{0}', space=vmem, size = 0x1000, scoped, tag = 'input window, operand 1, single buffered']
    #allocation7 [shape = 's32[2]{0}', space=sflag, size = 0x8, scoped, tag = 'scoped memory for tpu_custom_call.1']
    #allocation8 [shape = 's32[2]{0}', space=sflag, size = 0x8, scoped, tag = 'scoped memory for tpu_custom_call.1']
    #allocation9 [shape = 'u8[8192]{0}', space=vmem, size = 0x2000, scoped, tag = 'output window, operand 0']
    %18 = vsyncpa [#allocation7], 0
    %19 = vsyncpa [#allocation8], 0
    %s20 = scalar_lea.sflag [#allocation8], 1
    %21 = vsyncpa %s20, 0
    loop: start=0, step=1, limit=4
    $region2: #{tpu_custom_call.1} parent=1 // loop_pre_header
      _
    $region3: #{tpu_custom_call.1} parent=1 // loop_header
      %s23 = sphi 0, %s27
      %p24 = scmp.ge.s32.totalorder %s23, 4
      %s30 = sphi 0, %s42
      %s31 = sphi 0, %s38
      %s32 = sphi 0, %s30
      %s33 = sphi 0, %s31
      %s34 = sphi 0, %s32
      %s35 = sphi 0, %s33
      %s45 = sphi 0, %s47
      %s48 = sphi 0, %s45
      %s49 = sphi 0, %s48
      %s65 = sphi 0, %s49
      %s69 = sphi 0, %s69
      %s71 = sphi 0, %s69
      %s72 = sphi 0, %s71
      %s86 = sphi 0, %s72
      %s94 = sphi 0, %s96
      %s97 = sphi 0, %s94
      %s98 = sphi 0, %s97
      %s114 = sphi 0, %s98
      %s118 = sphi 0, %s118
      %s120 = sphi 0, %s118
      %s121 = sphi 0, %s120
      %s135 = sphi 0, %s121
      %s139 = sphi 0, %s139
      %s141 = sphi 0, %s139
      %s142 = sphi 0, %s141
      %s156 = sphi 0, %s142
      %s164 = sphi 0, %s166
      %s167 = sphi 0, %s164
      %s168 = sphi 0, %s167
      %s184 = sphi 0, %s168
    $region4: #{tpu_custom_call.1} parent=1 // loop_header_branch
      %26 = sbr.rel (%p24) target = $region8
    $region5: #{tpu_custom_call.1} parent=1 // loop_body
      %s28 = ssub.s32 %s23, 1
      %s29 = ssub.s32 %s23, 2
      %s36 = sadd.s32 1, %s31
      %p37 = scmp.ge.s32.totalorder %s36, 1
      %s38 = scalar_select %p37, 0, %s36
      %s39 = sadd.s32 1, %s30
      %s40 = scalar_select %p37, %s39, %s30
      %p41 = scmp.ge.s32.totalorder %s40, 2
      %s42 = scalar_select %p41, 0, %s40
      %s43 = ssub.s32 %s31, %s38
      %p44 = scmp.eq.s32.totalorder %s43, 0
      %s46 = sadd.s32 %s45, 1
      %s47 = scalar_select %p44, %s45, %s46
      %p50 = pneg %p44
      %p51 = scmp.eq.s32.totalorder %s23, 1
      %p52 = por %p50, %p51
      %p53 = scmp.ne.s32.totalorder %s45, %s48
      %p54 = scmp.eq.s32.totalorder %s23, 0
      %p55 = por %p53, %p54
      %p56 = scmp.ne.s32.totalorder %s45, %s48
      %p57 = scmp.eq.s32.totalorder %s28, 1
      %p58 = por %p56, %p57
      %p59 = scmp.ne.s32.totalorder %s48, %s49
      %p60 = scmp.eq.s32.totalorder %s28, 0
      %p61 = por %p59, %p60
      %p62 = scmp.ne.s32.totalorder %s48, %s49
      %p63 = scmp.eq.s32.totalorder %s29, 1
      %p64 = por %p62, %p63
      %p66 = scmp.ne.s32.totalorder %s49, %s65
      %p67 = scmp.eq.s32.totalorder %s29, 0
      %p68 = por %p66, %p67
      %s70 = sadd.s32 %s69, 1
      %p73 = scmp.eq.s32.totalorder %s23, 1
      %p74 = scmp.ne.s32.totalorder %s69, %s71
      %p75 = scmp.eq.s32.totalorder %s23, 0
      %p76 = por %p74, %p75
      %p77 = scmp.ne.s32.totalorder %s69, %s71
      %p78 = scmp.eq.s32.totalorder %s28, 1
      %p79 = por %p77, %p78
      %p80 = scmp.ne.s32.totalorder %s71, %s72
      %p81 = scmp.eq.s32.totalorder %s28, 0
      %p82 = por %p80, %p81
      %p83 = scmp.ne.s32.totalorder %s71, %s72
      %p84 = scmp.eq.s32.totalorder %s29, 1
      %p85 = por %p83, %p84
      %p87 = scmp.ne.s32.totalorder %s72, %s86
      %p88 = scmp.eq.s32.totalorder %s29, 0
      %p89 = por %p87, %p88
      %s90 = ssub.s32 %s30, %s42
      %s91 = ssub.s32 %s31, %s38
      %s92 = sor.u32 %s90, %s91
      %p93 = scmp.eq.s32.totalorder %s92, 0
      %s95 = sadd.s32 %s94, 1
      %s96 = scalar_select %p93, %s94, %s95
      %p99 = pneg %p93
      %p100 = scmp.eq.s32.totalorder %s23, 1
      %p101 = por %p99, %p100
      %p102 = scmp.ne.s32.totalorder %s94, %s97
      %p103 = scmp.eq.s32.totalorder %s23, 0
      %p104 = por %p102, %p103
      %p105 = scmp.ne.s32.totalorder %s94, %s97
      %p106 = scmp.eq.s32.totalorder %s28, 1
      %p107 = por %p105, %p106
      %p108 = scmp.ne.s32.totalorder %s97, %s98
      %p109 = scmp.eq.s32.totalorder %s28, 0
      %p110 = por %p108, %p109
      %p111 = scmp.ne.s32.totalorder %s97, %s98
      %p112 = scmp.eq.s32.totalorder %s29, 1
      %p113 = por %p111, %p112
      %p115 = scmp.ne.s32.totalorder %s98, %s114
      %p116 = scmp.eq.s32.totalorder %s29, 0
      %p117 = por %p115, %p116
      %s119 = sadd.s32 %s118, 1
      %p122 = scmp.eq.s32.totalorder %s23, 1
      %p123 = scmp.ne.s32.totalorder %s118, %s120
      %p124 = scmp.eq.s32.totalorder %s23, 0
      %p125 = por %p123, %p124
      %p126 = scmp.ne.s32.totalorder %s118, %s120
      %p127 = scmp.eq.s32.totalorder %s28, 1
      %p128 = por %p126, %p127
      %p129 = scmp.ne.s32.totalorder %s120, %s121
      %p130 = scmp.eq.s32.totalorder %s28, 0
      %p131 = por %p129, %p130
      %p132 = scmp.ne.s32.totalorder %s120, %s121
      %p133 = scmp.eq.s32.totalorder %s29, 1
      %p134 = por %p132, %p133
      %p136 = scmp.ne.s32.totalorder %s121, %s135
      %p137 = scmp.eq.s32.totalorder %s29, 0
      %p138 = por %p136, %p137
      %s140 = sadd.s32 %s139, 1
      %p143 = scmp.eq.s32.totalorder %s23, 1
      %p144 = scmp.ne.s32.totalorder %s139, %s141
      %p145 = scmp.eq.s32.totalorder %s23, 0
      %p146 = por %p144, %p145
      %p147 = scmp.ne.s32.totalorder %s139, %s141
      %p148 = scmp.eq.s32.totalorder %s28, 1
      %p149 = por %p147, %p148
      %p150 = scmp.ne.s32.totalorder %s141, %s142
      %p151 = scmp.eq.s32.totalorder %s28, 0
      %p152 = por %p150, %p151
      %p153 = scmp.ne.s32.totalorder %s141, %s142
      %p154 = scmp.eq.s32.totalorder %s29, 1
      %p155 = por %p153, %p154
      %p157 = scmp.ne.s32.totalorder %s142, %s156
      %p158 = scmp.eq.s32.totalorder %s29, 0
      %p159 = por %p157, %p158
      %s160 = ssub.s32 %s30, %s42
      %s161 = ssub.s32 %s31, %s38
      %s162 = sor.u32 %s160, %s161
      %p163 = scmp.eq.s32.totalorder %s162, 0
      %s165 = sadd.s32 %s164, 1
      %s166 = scalar_select %p163, %s164, %s165
      %p169 = pneg %p163
      %p170 = scmp.eq.s32.totalorder %s23, 1
      %p171 = por %p169, %p170
      %p172 = scmp.ne.s32.totalorder %s164, %s167
      %p173 = scmp.eq.s32.totalorder %s23, 0
      %p174 = por %p172, %p173
      %p175 = scmp.ne.s32.totalorder %s164, %s167
      %p176 = scmp.eq.s32.totalorder %s28, 1
      %p177 = por %p175, %p176
      %p178 = scmp.ne.s32.totalorder %s167, %s168
      %p179 = scmp.eq.s32.totalorder %s28, 0
      %p180 = por %p178, %p179
      %p181 = scmp.ne.s32.totalorder %s167, %s168
      %p182 = scmp.eq.s32.totalorder %s29, 1
      %p183 = por %p181, %p182
      %p185 = scmp.ne.s32.totalorder %s168, %s184
      %p186 = scmp.eq.s32.totalorder %s29, 0
      %p187 = por %p185, %p186
      %p188 = scmp.le.s32.totalorder 1, %s23
      %p189 = scmp.lt.s32.totalorder %s23, 3
      %p190 = pnand %p188, %p189
      %p191 = pneg %p190
      // Predicated region
      $region9: #{tpu_custom_call.1} parent=5 // pred_check
        _
      $region10: #{tpu_custom_call.1} parent=5 // pred_check_branch
        %193 = sbr.rel (%p190) target = $region12
      $region11: #{tpu_custom_call.1} parent=5 // pred_region
        %s194 = ssub.s32 %s23, 1
        // Predicated region
        $region13: #{tpu_custom_call.1} parent=11 // pred_check
          %p195 = pneg %p61
        $region14: #{tpu_custom_call.1} parent=11 // pred_check_branch
          %197 = sbr.rel (%p195) target = $region16
        $region15: #{tpu_custom_call.1} parent=11 // pred_region
          %s199 = ssub.s32 128, 128
          %200 = vsyncadd [#allocation7], %s199
          %s201 = smul.addr %s33, 128
          %s202 = scalar_lea.hbm %s1, %s201
          %s204 = sshll.u32 [#allocation6], 4
          %s205 = int_to_ptr.vmem [resolvable:$true] %s204
          %207 = dma.hbm_to_vmem [thread:$0]  %s202, 128, %s205, [#allocation7]
        $region16: #{tpu_custom_call.1} parent=11 // pred_fallthru
          _
        // Predicated region
        $region17: #{tpu_custom_call.1} parent=11 // pred_check
          %p208 = pneg %p82
        $region18: #{tpu_custom_call.1} parent=11 // pred_check_branch
          %210 = sbr.rel (%p208) target = $region20
        $region19: #{tpu_custom_call.1} parent=11 // pred_region
          _
        $region20: #{tpu_custom_call.1} parent=11 // pred_fallthru
          _
        // Predicated region
        $region21: #{tpu_custom_call.1} parent=11 // pred_check
          %p211 = pneg %p131
        $region22: #{tpu_custom_call.1} parent=11 // pred_check_branch
          %213 = sbr.rel (%p211) target = $region24
        $region23: #{tpu_custom_call.1} parent=11 // pred_region
          _
        $region24: #{tpu_custom_call.1} parent=11 // pred_fallthru
          _
        // Predicated region
        $region25: #{tpu_custom_call.1} parent=11 // pred_check
          %p214 = pneg %p152
        $region26: #{tpu_custom_call.1} parent=11 // pred_check_branch
          %216 = sbr.rel (%p214) target = $region28
        $region27: #{tpu_custom_call.1} parent=11 // pred_region
          _
        $region28: #{tpu_custom_call.1} parent=11 // pred_fallthru
          _
      $region12: #{tpu_custom_call.1} parent=5 // pred_fallthru
        _
      %p217 = scmp.lt.s32.totalorder %s23, 2
      // Predicated region
      $region29: #{tpu_custom_call.1} parent=5 // pred_check
        %p218 = pneg %p217
      $region30: #{tpu_custom_call.1} parent=5 // pred_check_branch
        %220 = sbr.rel (%p218) target = $region32
      $region31: #{tpu_custom_call.1} parent=5 // pred_region
        // Predicated region
        $region33: #{tpu_custom_call.1} parent=31 // pred_check
          %p221 = pneg %p104
        $region34: #{tpu_custom_call.1} parent=31 // pred_check_branch
          %223 = sbr.rel (%p221) target = $region36
        $region35: #{tpu_custom_call.1} parent=31 // pred_region
          %p224 = scmp.lt.s32.totalorder %s30, 1
          %s225 = scalar_select %p224, %s30, 1
          %p226 = scmp.lt.s32.totalorder %s31, 0
          %s227 = scalar_select %p226, %s31, 0
          %s228 = sadd.s32 %s227, %s225
          %s229 = smul.addr %s228, 8
          %s230 = scalar_lea.vmem %s3, %s229
        $region36: #{tpu_custom_call.1} parent=31 // pred_fallthru
          _
      $region32: #{tpu_custom_call.1} parent=5 // pred_fallthru
        _
      %p231 = scmp.le.s32.totalorder 1, %s23
      %p232 = scmp.lt.s32.totalorder %s23, 3
      %p233 = pnand %p231, %p232
      %p234 = pneg %p233
      // Predicated region
      $region37: #{tpu_custom_call.1} parent=5 // pred_check
        _
      $region38: #{tpu_custom_call.1} parent=5 // pred_check_branch
        %236 = sbr.rel (%p233) target = $region40
      $region39: #{tpu_custom_call.1} parent=5 // pred_region
        %s237 = ssub.s32 %s23, 1
        // Predicated region
        $region41: #{tpu_custom_call.1} parent=39 // pred_check
          %p238 = pneg %p61
        $region42: #{tpu_custom_call.1} parent=39 // pred_check_branch
          %240 = sbr.rel (%p238) target = $region44
        $region43: #{tpu_custom_call.1} parent=39 // pred_region
          %241 = dma.done [#allocation7], 128
        $region44: #{tpu_custom_call.1} parent=39 // pred_fallthru
          _
        %p242 = pneg %p61
        %p243 = pneg %p58
        %p244 = pneg %p82
        %p245 = pneg %p79
        %p246 = scmp.lt.s32.totalorder %s32, 1
        %s247 = scalar_select %p246, %s32, 1
        %p248 = scmp.lt.s32.totalorder %s33, 0
        %s249 = scalar_select %p248, %s33, 0
        %s250 = sadd.s32 %s249, %s247
        %s251 = smul.addr %s250, 8
        %s252 = scalar_lea.vmem %s3, %s251
        %p253 = pneg %p110
        %p254 = pneg %p107
        %p255 = pneg %p131
        %p256 = pneg %p128
        %p257 = pneg %p152
        %p258 = pneg %p149
        %p259 = pneg %p180
        %p260 = pneg %p177
        %s261 = sand.u32 %s167, 1
        %s262 = scalar_lea.sflag [#allocation8], %s261
        %s263 = sand.u32 %s167, 1
        %s264 = smul.addr %s263, 8
        %s265 = scalar_lea.vmem [#allocation9], %s264
        %p266 = scmp.lt.s32.totalorder %s32, 1
        %s267 = scalar_select %p266, %s32, 1
        %p268 = scmp.lt.s32.totalorder %s33, 0
        %s269 = scalar_select %p268, %s33, 0
        %s270 = sadd.s32 %s269, %s267
        %s271 = smul.addr %s270, 8
        %s272 = scalar_lea.vmem %s3, %s271
        %s273 = smul.u32 %s33, 8
        loop: start=0, step=1, limit=8
        $region45: #{tpu_custom_call.1} parent=39 // loop_pre_header
          _
        $region46: #{tpu_custom_call.1} parent=39 // loop_header
          %s275 = sphi 0, %s279
          %p276 = scmp.ge.s32.totalorder %s275, 8
        $region47: #{tpu_custom_call.1} parent=39 // loop_header_branch
          %278 = sbr.rel (%p276) target = $region51
        $region48: #{tpu_custom_call.1} parent=39 // loop_body
          %s280 = sadd.s32 %s273, %s275
          %s281 = sshra.s32 %s280, 7
          %s282 = sand.u32 %s280, 127
          %s283 = sadd.s32 %s281, %s32
          %s284 = smul.u32 %s283, 128
          %s285 = sshra.s32 %s280, 7
          %s286 = sand.u32 %s280, 127
          %s287 = sadd.s32 %s284, %s286
          %s288 = sld [smem:[#allocation5 + %s287]]
          %s289 = smul.addr %s288, 16
          %s290 = scalar_lea.hbm %s6, %s289
          %s291 = scalar_lea.vmem [#allocation2], %s275
          // Predicated region
          $region52: #{tpu_custom_call.1} parent=48 // pred_check
            _
          $region53: #{tpu_custom_call.1} parent=48 // pred_check_branch
            %293 = sbr.rel target = $region55
          $region54: #{tpu_custom_call.1} parent=48 // pred_region
            %294 = sst [smem:[#allocation12]] [#allocation11]
            %295 = sst [smem:[#allocation13]] [#allocation10]
          $region55: #{tpu_custom_call.1} parent=48 // pred_fallthru
            _
          %297 = shalt.err (0)
          %s299 = sshll.u32 %s291, 4
          %s300 = int_to_ptr.vmem [resolvable:$true] %s299
          %302 = dma.hbm_to_vmem [thread:$0]  %s290, 16, %s300, [#allocation3]
        $region49: #{tpu_custom_call.1} parent=39 // loop_footer
          %s279 = sadd.s32 1, %s275
        $region50: #{tpu_custom_call.1} parent=39 // loop_footer_branch
          %274 = sbr.rel target = $region46
        $region51: #{tpu_custom_call.1} parent=39 // loop_exit
          _
        %v303 = vld [vmem:[#allocation6] sm:$0xff]
        %v304 = vld [vmem:[%s272] sm:$0xff]
        %vm305 = vcmp.eq.s32.totalorder %v304, 0
        %v306 = vsel %vm305, 1, 0
        %v307 = vcvt.s32.f32 %v306
        %v308 = vld [vmem:[%s2] sm:$0x1]
        %310 = vset.pattern.permute.xlu0 0
        %311 = vperm.xlu0 %310, %v307
        %v312 = vpop.permute.xlu0 %311
        %v314 = vlaneseq
        %v315 = vshrl.u32 %v314, 7
        %v316 = vsub.s32 0, %v315
        %v317 = vrot.slane %v308, %v316
        %v318 = vmul.f32 %v312, %v317
        %v319 = vadd.f32 %v318, 0.0
        %vm320 = vcmp.eq.s32.totalorder %v304, 1
        %v321 = vsel %vm320, 1, 0
        %v322 = vcvt.s32.f32 %v321
        %v323 = vld [vmem:[%s2 + $0x1] sm:$0x1]
        %325 = vset.pattern.permute.xlu0 0
        %326 = vperm.xlu0 %325, %v322
        %v327 = vpop.permute.xlu0 %326
        %v329 = vlaneseq
        %v330 = vshrl.u32 %v329, 7
        %v331 = vsub.s32 0, %v330
        %v332 = vrot.slane %v323, %v331
        %v333 = vmul.f32 %v327, %v332
        %v334 = vadd.f32 %v319, %v333
        %v335 = vadd.f32 %v303, %v334
        loop: start=0, step=1, limit=8
        $region56: #{tpu_custom_call.1} parent=39 // loop_pre_header
          _
        $region57: #{tpu_custom_call.1} parent=39 // loop_header
          %s337 = sphi 0, %s341
          %p338 = scmp.ge.s32.totalorder %s337, 8
        $region58: #{tpu_custom_call.1} parent=39 // loop_header_branch
          %340 = sbr.rel (%p338) target = $region62
        $region59: #{tpu_custom_call.1} parent=39 // loop_body
          %s342 = smul.u32 1, 1
          %s343 = sshll.u32 %s342, 4
          %344 = dma.done [#allocation3], %s343
        $region60: #{tpu_custom_call.1} parent=39 // loop_footer
          %s341 = sadd.s32 1, %s337
        $region61: #{tpu_custom_call.1} parent=39 // loop_footer_branch
          %336 = sbr.rel target = $region57
        $region62: #{tpu_custom_call.1} parent=39 // loop_exit
          _
        %v345 = vld [vmem:[#allocation2] sm:$0xff]
        %v346 = vadd.f32 %v335, %v345
        %347 = vadd.xlane.f32.xlu0 %v346
        %v348 = vpop.xlane.xlu0 %347
        %v349 = vrcp.pop 128.0
        %v350 = vmul.f32 %v348, %v349
        %v351 = vsub.f32 %v346, %v350
        %v352 = vmul.f32 %v351, %v351
        %353 = vadd.xlane.f32.xlu0 %v352
        %v354 = vpop.xlane.xlu0 %353
        %v355 = vmul.f32 %v354, %v349
        %v356 = vadd.f32 %v355, 1e-12
        %v357 = vrsqrt.pop %v356
        %v358 = vmul.f32 %v351, %v357
        %v359 = vld [vmem:[%s4] sm:$0x1]
        %v361 = vlaneseq
        %v362 = vshrl.u32 %v361, 7
        %v363 = vsub.s32 0, %v362
        %v364 = vrot.slane %v359, %v363
        %v366 = vmul.f32 %v358, %v364
        %v367 = vld [vmem:[%s5] sm:$0x1]
        %v369 = vlaneseq
        %v370 = vshrl.u32 %v369, 7
        %v371 = vsub.s32 0, %v370
        %v372 = vrot.slane %v367, %v371
        %v374 = vadd.f32 %v366, %v372
        %375 = vst [vmem:[%s265] sm:$0xff] %v374
        %s376 = sand.u32 %s167, 1
        %s377 = scalar_lea.sflag [#allocation8], %s376
        %s378 = sand.u32 %s167, 1
        %s379 = smul.addr %s378, 8
        %s380 = scalar_lea.vmem [#allocation9], %s379
        // Predicated region
        $region63: #{tpu_custom_call.1} parent=39 // pred_check
          %p381 = pneg %p177
        $region64: #{tpu_custom_call.1} parent=39 // pred_check_branch
          %383 = sbr.rel (%p381) target = $region66
        $region65: #{tpu_custom_call.1} parent=39 // pred_region
          %s385 = ssub.s32 128, 128
          %386 = vsyncadd %s377, %s385
          %s387 = sadd.s32 %s33, %s32
          %s388 = smul.addr %s387, 128
          %s389 = scalar_lea.hbm %s7, %s388
          %s391 = sshll.u32 %s380, 4
          %s392 = int_to_ptr.vmem [resolvable:$true] %s391
          %394 = dma.vmem_to_hbm [thread:$0]  %s392, 128, %s389, %s377
        $region66: #{tpu_custom_call.1} parent=39 // pred_fallthru
          _
      $region40: #{tpu_custom_call.1} parent=5 // pred_fallthru
        _
      %p395 = scmp.le.s32.totalorder 2, %s23
      // Predicated region
      $region67: #{tpu_custom_call.1} parent=5 // pred_check
        %p396 = pneg %p395
      $region68: #{tpu_custom_call.1} parent=5 // pred_check_branch
        %398 = sbr.rel (%p396) target = $region70
      $region69: #{tpu_custom_call.1} parent=5 // pred_region
        %s399 = ssub.s32 %s23, 2
        // Predicated region
        $region71: #{tpu_custom_call.1} parent=69 // pred_check
          %p400 = pneg %p183
        $region72: #{tpu_custom_call.1} parent=69 // pred_check_branch
          %402 = sbr.rel (%p400) target = $region74
        $region73: #{tpu_custom_call.1} parent=69 // pred_region
          %s403 = sand.u32 %s168, 1
          %s404 = scalar_lea.sflag [#allocation8], %s403
          %s405 = sand.u32 %s168, 1
          %s406 = smul.addr %s405, 8
          %s407 = scalar_lea.vmem [#allocation9], %s406
          %408 = dma.done %s404, 128
        $region74: #{tpu_custom_call.1} parent=69 // pred_fallthru
          _
      $region70: #{tpu_custom_call.1} parent=5 // pred_fallthru
        _
    $region6: #{tpu_custom_call.1} parent=1 // loop_footer
      %s27 = sadd.s32 1, %s23
    $region7: #{tpu_custom_call.1} parent=1 // loop_footer_branch
      %22 = sbr.rel target = $region3
    $region8: #{tpu_custom_call.1} parent=1 // loop_exit
      _
    %409 = vsyncpa [#allocation7], 1
    %s410 = scalar_lea.sflag [#allocation7], 1
    %411 = vsyncpa %s410, 1
    %412 = vsyncpa [#allocation8], 1
    %s413 = scalar_lea.sflag [#allocation8], 1
    %414 = vsyncpa %s413, 1
  %415 = vsyncmov [#allocation3]
  %s416 = vpop.sfrf %415
  %p417 = scmp.eq.s32.totalorder %s416, 0
  %p418 = pneg %p417
  %420 = shalt.err (%p418)

</llo_original>
